<compile_context>
chip_gen: v5e
topology: v5e:2x2
jax: 0.10.0
libtpu: 0.0.40
codegen_flags: <defaults>
</compile_context>

<pallas_src>
import functools
import math

import jax
import jax.numpy as jnp
from jax.experimental import pallas as pl
from jax.experimental.pallas import tpu as pltpu


_INV_SQRT2 = 1.0 / math.sqrt(2.0)
_SQRT_2_OVER_PI = math.sqrt(2.0 / math.pi)


def _gelu(h, approx):
    if approx:
        # tanh-form GELU: the transcendental goes to the (otherwise idle) EUP.
        return 0.5 * h * (1.0 + jnp.tanh(_SQRT_2_OVER_PI * (h + 0.044715 * (h * h * h))))
    # Exact erf-GELU in f32 -- matches torch.nn.GELU() default.
    return 0.5 * h * (1.0 + jax.lax.erf(h * _INV_SQRT2))


# --------------------------------------------------------------------------
# Kernels
# --------------------------------------------------------------------------
def mlp_kernel_resident(x_ref, w1_ref, b1_ref, w2_ref, b2_ref, o_ref, *,
                        approx_gelu):
    """Weights fully resident in VMEM: one grid step per row tile.

    x_ref:  (tm, C)  input dtype (cast to bf16 in-kernel)
    w1_ref: (C, H)   compute dtype (bf16), fetched once for the whole grid
    b1_ref: (1, H)   f32
    w2_ref: (H, C)   compute dtype (bf16), fetched once for the whole grid
    b2_ref: (1, C)   f32
    o_ref:  (tm, C)  output dtype
    """
    x = x_ref[...].astype(w1_ref.dtype)          # fold activation cast in-kernel
    h = jnp.dot(x, w1_ref[...], preferred_element_type=jnp.float32)
    h = _gelu(h + b1_ref[...], approx_gelu)
    y = jnp.dot(h.astype(w2_ref.dtype), w2_ref[...],
                preferred_element_type=jnp.float32)
    # dropout: p=0.0 / eval mode -> identity.
    # TODO(synk): training-mode dropout (p>0) would need pltpu.prng_* masking.
    o_ref[...] = (y + b2_ref[...]).astype(o_ref.dtype)


def mlp_kernel_tiled(x_ref, w1_ref, b1_ref, w2_ref, b2_ref, o_ref, acc_ref, *,
                     approx_gelu):
    """One (row-tile i, hidden-tile j) grid step; weights streamed from HBM.

    acc_ref: (tm, C) f32 accumulator, resident across the hidden-tile axis.
    """
    j = pl.program_id(1)

    @pl.when(j == 0)
    def _():
        acc_ref[...] = jnp.zeros_like(acc_ref)

    x = x_ref[...].astype(w1_ref.dtype)
    h = jnp.dot(x, w1_ref[...], preferred_element_type=jnp.float32)
    h = _gelu(h + b1_ref[...], approx_gelu)
    acc_ref[...] += jnp.dot(h.astype(w2_ref.dtype), w2_ref[...],
                            preferred_element_type=jnp.float32)

    @pl.when(j == pl.num_programs(1) - 1)
    def _():
        # dropout: p=0.0 / eval mode -> identity.
        o_ref[...] = (acc_ref[...] + b2_ref[...]).astype(o_ref.dtype)


# --------------------------------------------------------------------------
# Planning helpers
# --------------------------------------------------------------------------
def _round_up(x, m):
    return (x + m - 1) // m * m


def _vmem_capacity_bytes():
    """Per-core VMEM capacity; conservative fallback if the query is unavailable."""
    try:
        info = pltpu.get_tpu_info()
        for attr in ("vmem_capacity_bytes", "vmem_bytes", "vmem_size_bytes"):
            v = getattr(info, attr, None)
            if v:
                return int(v)
    except Exception:
        pass
    return 64 << 20  # v7x per-TensorCore VMEM -- safe on every generation


def _tiled_plan_bytes(tm, th, C, x_item, out_item, c_item):
    """VMEM bytes for the weight-streaming plan at a given (tm, th)."""
    w_tiles = 2 * 2 * C * th * c_item          # W1 + W2 tiles, double-buffered
    b_tiles = 2 * 2 * th * 4 + C * 4           # b1 tiles (double-buffered) + b2
    act = 2 * tm * C * (x_item + out_item)     # x / out double buffers
    acc = 4 * tm * C                           # f32 accumulator scratch
    interm = 8 * tm * th                       # in-flight f32 + bf16 hidden chunk
    return w_tiles + b_tiles + act + acc + interm


def _pick_hidden_tile(H, tm, C, budget, x_item, out_item, c_item):
    """Largest th (multiple of 128, dividing H) whose VMEM plan fits `budget`."""
    if H % 128 != 0:
        return H                               # tiny/odd H: use the full extent
    for t in range(H, 0, -128):
        if H % t == 0 and _tiled_plan_bytes(tm, t, C, x_item, out_item, c_item) <= budget:
            return t
    for t in range(128, H + 1, 128):           # nothing fits: smallest legal tile
        if H % t == 0:
            return t
    return H


# --------------------------------------------------------------------------
# Wrapper
# --------------------------------------------------------------------------
def mlp_forward(x, w1, b1, w2, b2, *, tm=None, th=None,
                compute_dtype=jnp.bfloat16, approx_gelu=False):
    """x: (B, T, C) -> (B, T, C). Fused Linear -> GELU -> Linear Pallas kernel."""
    B, T, C = x.shape
    H = w1.shape[1]
    M = B * T
    out_dtype = x.dtype
    x_item = jnp.dtype(x.dtype).itemsize
    out_item = jnp.dtype(out_dtype).itemsize
    c_item = jnp.dtype(compute_dtype).itemsize

    # Weights/biases: cast only if needed (pre-store bf16 upstream -> no-op here).
    w1c = w1 if w1.dtype == compute_dtype else w1.astype(compute_dtype)
    w2c = w2 if w2.dtype == compute_dtype else w2.astype(compute_dtype)
    b1f = b1.reshape(1, H).astype(jnp.float32)
    b2f = b2.reshape(1, C).astype(jnp.float32)

    # Activation cast is folded into the kernel -> x stays in its own dtype.
    x2d = x.reshape(M, C)

    # ------------------------------ tiling -------------------------------
    vmem_cap = _vmem_capacity_bytes()
    usable = int(vmem_cap * 0.65)              # headroom for internal scratch

    M8 = _round_up(M, 8)
    if tm is None:
        tm = 512                               # >= v6e ridge when streaming weights
    tm = max(8, min(_round_up(tm, 8), M8))
    # Keep >= 2 row tiles so the "parallel" axis can shard across TensorCores.
    while tm > 8 and (M8 + tm - 1) // tm < 2:
        tm = max(8, _round_up(tm // 2, 8))
    M_pad = _round_up(M, tm)
    if M_pad != M:
        x2d = jnp.pad(x2d, ((0, M_pad - M), (0, 0)))
    n_row = M_pad // tm

    # Weights-resident fast path check.
    weight_bytes = 2 * C * H * c_item + (H + C) * 4
    resident_bytes = (weight_bytes
                      + 2 * tm * C * (x_item + out_item)   # x/out double buffers
                      + 8 * tm * H)                        # in-flight hidden interm.
    resident = (th is None or th == H) and resident_bytes <= usable

    if resident:
        plan_bytes = resident_bytes
        grid = (n_row,)
        kernel = functools.partial(mlp_kernel_resident, approx_gelu=approx_gelu)
        const1 = pl.Buffered(1)                # constant index -> single buffer
        in_specs = [
            pl.BlockSpec((tm, C), lambda i: (i, 0)),                     # x rows
            pl.BlockSpec((C, H), lambda i: (0, 0), pipeline_mode=const1),  # W1
            pl.BlockSpec((1, H), lambda i: (0, 0), pipeline_mode=const1),  # b1
            pl.BlockSpec((H, C), lambda i: (0, 0), pipeline_mode=const1),  # W2
            pl.BlockSpec((1, C), lambda i: (0, 0), pipeline_mode=const1),  # b2
        ]
        out_specs = pl.BlockSpec((tm, C), lambda i: (i, 0))
        scratch = []
        dims = ("parallel",)
        weight_hbm_reads = 1
    else:
        if th is None:
            th = _pick_hidden_tile(H, tm, C, usable, x_item, out_item, c_item)
        assert H % th == 0, "hidden tile must divide H = 4*C"
        n_h = H // th
        plan_bytes = _tiled_plan_bytes(tm, th, C, x_item, out_item, c_item)
        grid = (n_row, n_h)
        kernel = functools.partial(mlp_kernel_tiled, approx_gelu=approx_gelu)
        w_buf = pl.Buffered(2) if n_h > 1 else pl.Buffered(1)
        in_specs = [
            pl.BlockSpec((tm, C), lambda i, j: (i, 0)),                        # x rows
            pl.BlockSpec((C, th), lambda i, j: (0, j), pipeline_mode=w_buf),   # W1 chunk
            pl.BlockSpec((1, th), lambda i, j: (0, j), pipeline_mode=w_buf),   # b1 chunk
            pl.BlockSpec((th, C), lambda i, j: (j, 0), pipeline_mode=w_buf),   # W2 chunk
            pl.BlockSpec((1, C), lambda i, j: (0, 0),
                         pipeline_mode=pl.Buffered(1)),                        # b2
        ]
        out_specs = pl.BlockSpec((tm, C), lambda i, j: (i, 0))
        scratch = [pltpu.VMEM((tm, C), jnp.float32)]
        dims = ("parallel", "arbitrary")
        weight_hbm_reads = n_row               # weights re-streamed per row tile

    # Explicit VMEM limit derived from the plan (default scoped limits are
    # 16/32 MiB and would otherwise be the binding constraint).
    vmem_limit = min(int(vmem_cap * 0.9), max(int(plan_bytes * 1.4), 32 << 20))
    vmem_limit = max(vmem_limit,
                     min(int(plan_bytes) + (2 << 20), int(vmem_cap * 0.95)))

    cost = pl.CostEstimate(
        flops=int(4 * M_pad * C * H),               # two (M,C)x(C,H)-class matmuls
        transcendentals=int(M_pad * H),             # one GELU per hidden activation
        bytes_accessed=int(M_pad * C * x_item + M_pad * C * out_item
                           + weight_hbm_reads * (w1c.size * c_item
                                                 + w2c.size * c_item
                                                 + b1f.size * 4)
                           + b2f.size * 4),
    )

    out2d = pl.pallas_call(
        kernel,
        out_shape=jax.ShapeDtypeStruct((M_pad, C), out_dtype),
        grid_spec=pltpu.PrefetchScalarGridSpec(
            num_scalar_prefetch=0,
            grid=grid,
            in_specs=in_specs,
            out_specs=out_specs,
            scratch_shapes=scratch,
        ),
        compiler_params=pltpu.CompilerParams(
            dimension_semantics=dims,
            vmem_limit_bytes=vmem_limit),
        cost_estimate=cost,
    )(x2d, w1c, b1f, w2c, b2f)

    return out2d[:M].reshape(B, T, C)


def init_params(key, n_embd, bias=True, dtype=jnp.float32):
    """Deterministic init mirroring nn.Linear (uniform +-1/sqrt(fan_in))."""
    h = 4 * n_embd
    k1, k2, k3, k4 = jax.random.split(key, 4)
    bound_fc = 1.0 / math.sqrt(n_embd)
    bound_proj = 1.0 / math.sqrt(h)
    # stored as (in, out), i.e. already transposed relative to torch's (out, in)
    w1 = jax.random.uniform(k1, (n_embd, h), dtype, -bound_fc, bound_fc)
    b1 = (jax.random.uniform(k2, (1, h), dtype, -bound_fc, bound_fc)
          if bias else jnp.zeros((1, h), dtype))
    w2 = jax.random.uniform(k3, (h, n_embd), dtype, -bound_proj, bound_proj)
    b2 = (jax.random.uniform(k4, (1, n_embd), dtype, -bound_proj, bound_proj)
          if bias else jnp.zeros((1, n_embd), dtype))
    return w1, b1, w2, b2


if __name__ == "__main__":
    # config: n_embd=32, bias=True, dropout=0.0   (B=2, T=8)
    B, T, C = 2, 8, 32
    key = jax.random.PRNGKey(0)
    kx, kp = jax.random.split(key)
    x = jax.random.normal(kx, (B, T, C), jnp.float32)
    w1, b1, w2, b2 = init_params(kp, C, bias=True)

    # Pre-store the weights in bf16 once (no per-call cast inside the hot path).
    w1_k = w1.astype(jnp.bfloat16)
    w2_k = w2.astype(jnp.bfloat16)

    # At this toy size the weights-resident fast path is taken and tm is
    # auto-halved to 8 so the "parallel" row axis still has 2 tiles.
    out = mlp_forward(x, w1_k, b1, w2_k, b2)
    jax.block_until_ready(out)

    # Cross-check against a plain-JAX f32 reference (exact erf GELU, like
    # torch.nn.GELU()).  The kernel runs the MXU in bf16 with f32 accumulation,
    # so allow bf16-level tolerance.
    h_ref = x.reshape(-1, C) @ w1 + b1.reshape(1, -1)
    h_ref = 0.5 * h_ref * (1.0 + jax.lax.erf(h_ref / math.sqrt(2.0)))
    y_ref = (h_ref @ w2 + b2.reshape(1, -1)).reshape(B, T, C)
    assert jnp.allclose(out, y_ref, atol=5e-2, rtol=5e-2), "mismatch vs reference"

    print("KERNEL_OK")
</pallas_src>

<mosaic_0001>
module attributes {stable_mosaic.version = 11 : i64} {
  func.func @mlp_kernel_resident(%arg0: i32, %arg1: memref<8x32xf32, #tpu.memory_space<vmem>>, %arg2: memref<32x128xbf16, #tpu.memory_space<vmem>>, %arg3: memref<1x128xf32, #tpu.memory_space<vmem>>, %arg4: memref<128x32xbf16, #tpu.memory_space<vmem>>, %arg5: memref<1x32xf32, #tpu.memory_space<vmem>>, %arg6: memref<8x32xf32, #tpu.memory_space<vmem>>) attributes {dimension_semantics = [#tpu.dimension_semantics<parallel>], iteration_bounds = array<i64: 2>, scalar_prefetch = 0 : i64, scratch_operands = 0 : i64, tpu.core_type = #tpu.core_type<tc>, window_params = [{transform_indices = @transform_0, window_bounds = array<i64: 8, 32>}, {pipeline_mode = #tpu.pipeline_mode<synchronous>, transform_indices = @transform_1, window_bounds = array<i64: 32, 128>}, {pipeline_mode = #tpu.pipeline_mode<synchronous>, transform_indices = @transform_2, window_bounds = array<i64: 1, 128>}, {pipeline_mode = #tpu.pipeline_mode<synchronous>, transform_indices = @transform_3, window_bounds = array<i64: 128, 32>}, {pipeline_mode = #tpu.pipeline_mode<synchronous>, transform_indices = @transform_4, window_bounds = array<i64: 1, 32>}, {transform_indices = @transform_5, window_bounds = array<i64: 8, 32>}]} {
    %c0 = arith.constant 0 : index
    %c0_0 = arith.constant 0 : index
    %0 = vector.load %arg1[%c0, %c0_0] : memref<8x32xf32, #tpu.memory_space<vmem>>, vector<8x32xf32>
    %1 = arith.truncf %0 : vector<8x32xf32> to vector<8x32xbf16>
    %c0_1 = arith.constant 0 : index
    %c0_2 = arith.constant 0 : index
    %2 = vector.load %arg2[%c0_1, %c0_2] : memref<32x128xbf16, #tpu.memory_space<vmem>>, vector<32x128xbf16>
    %cst = arith.constant dense<0.000000e+00> : vector<8x128xf32>
    %3 = tpu.matmul %1, %2, %cst {dimension_numbers = #tpu.dot_dimension_numbers<[1], [0], [0], [1], [0, 0, 1, 1], [], []>} : vector<8x32xbf16>, vector<32x128xbf16>, vector<8x128xf32> -> vector<8x128xf32>
    %c0_3 = arith.constant 0 : index
    %c0_4 = arith.constant 0 : index
    %4 = vector.load %arg3[%c0_3, %c0_4] : memref<1x128xf32, #tpu.memory_space<vmem>>, vector<1x128xf32>
    %5 = vector.broadcast %4 : vector<1x128xf32> to vector<8x128xf32>
    %6 = arith.addf %3, %5 : vector<8x128xf32>
    %cst_5 = arith.constant 5.000000e-01 : f32
    %7 = vector.broadcast %cst_5 : f32 to vector<8x128xf32>
    %8 = arith.mulf %7, %6 : vector<8x128xf32>
    %cst_6 = arith.constant 0.707106769 : f32
    %9 = vector.broadcast %cst_6 : f32 to vector<8x128xf32>
    %10 = arith.mulf %6, %9 : vector<8x128xf32>
    %11 = math.erf %10 : vector<8x128xf32>
    %cst_7 = arith.constant 1.000000e+00 : f32
    %12 = vector.broadcast %cst_7 : f32 to vector<8x128xf32>
    %13 = arith.addf %12, %11 : vector<8x128xf32>
    %14 = arith.mulf %8, %13 : vector<8x128xf32>
    %15 = arith.truncf %14 : vector<8x128xf32> to vector<8x128xbf16>
    %c0_8 = arith.constant 0 : index
    %c0_9 = arith.constant 0 : index
    %16 = vector.load %arg4[%c0_8, %c0_9] : memref<128x32xbf16, #tpu.memory_space<vmem>>, vector<128x32xbf16>
    %cst_10 = arith.constant dense<0.000000e+00> : vector<8x32xf32>
    %17 = tpu.matmul %15, %16, %cst_10 {dimension_numbers = #tpu.dot_dimension_numbers<[1], [0], [0], [1], [0, 0, 1, 1], [], []>} : vector<8x128xbf16>, vector<128x32xbf16>, vector<8x32xf32> -> vector<8x32xf32>
    %c0_11 = arith.constant 0 : index
    %c0_12 = arith.constant 0 : index
    %18 = vector.load %arg5[%c0_11, %c0_12] : memref<1x32xf32, #tpu.memory_space<vmem>>, vector<1x32xf32>
    %19 = vector.broadcast %18 : vector<1x32xf32> to vector<8x32xf32>
    %20 = arith.addf %17, %19 : vector<8x32xf32>
    %c0_13 = arith.constant 0 : index
    %c0_14 = arith.constant 0 : index
    %21 = vector.load %arg6[%c0_13, %c0_14] : memref<8x32xf32, #tpu.memory_space<vmem>>, vector<8x32xf32>
    tpu.vector_store %arg6[%c0_13, %c0_14], %20 {strides = array<i32>} : memref<8x32xf32, #tpu.memory_space<vmem>>, vector<8x32xf32>,
    return
  }
  func.func @transform_0(%arg0: i32) -> (i32, i32) {
    %c0_i32 = arith.constant 0 : i32
    %c0_i32_0 = arith.constant 0 : i32
    return %arg0, %c0_i32 : i32, i32
  }
  func.func @transform_1(%arg0: i32) -> (i32, i32) {
    %c0_i32 = arith.constant 0 : i32
    %c0_i32_0 = arith.constant 0 : i32
    %c0_i32_1 = arith.constant 0 : i32
    return %c0_i32, %c0_i32_0 : i32, i32
  }
  func.func @transform_2(%arg0: i32) -> (i32, i32) {
    %c0_i32 = arith.constant 0 : i32
    %c0_i32_0 = arith.constant 0 : i32
    %c0_i32_1 = arith.constant 0 : i32
    return %c0_i32, %c0_i32_0 : i32, i32
  }
  func.func @transform_3(%arg0: i32) -> (i32, i32) {
    %c0_i32 = arith.constant 0 : i32
    %c0_i32_0 = arith.constant 0 : i32
    %c0_i32_1 = arith.constant 0 : i32
    return %c0_i32, %c0_i32_0 : i32, i32
  }
  func.func @transform_4(%arg0: i32) -> (i32, i32) {
    %c0_i32 = arith.constant 0 : i32
    %c0_i32_0 = arith.constant 0 : i32
    %c0_i32_1 = arith.constant 0 : i32
    return %c0_i32, %c0_i32_0 : i32, i32
  }
  func.func @transform_5(%arg0: i32) -> (i32, i32) {
    %c0_i32 = arith.constant 0 : i32
    %c0_i32_0 = arith.constant 0 : i32
    return %arg0, %c0_i32 : i32, i32
  }
}

</mosaic_0001>

<llo_original>
// kernel: tpu_custom_call.1
$region0: #{tpu_custom_call.1}
  #allocation0 [shape = 'u32[]', space=smem, size = 0x4, offset = 0x4, fixed_abs, tag = 'smem constant byte address 0x4 - core index']
  #allocation1 [shape = 'u32[72,128]{1,0:T(1,128)}', space=vmem, size = 0x9000, scoped, tag = 'internal scratch']
  %s0 = inlined_call_operand.vmem [shape: f32[16,32], index: 0, kind: input, shape index: {}]
  %s1 = inlined_call_operand.vmem [shape: bf16[32,128], index: 1, kind: input, shape index: {}]
  %s2 = inlined_call_operand.vmem [shape: f32[1,128], index: 2, kind: input, shape index: {}]
  %s3 = inlined_call_operand.vmem [shape: bf16[128,32], index: 3, kind: input, shape index: {}]
  %s4 = inlined_call_operand.vmem [shape: f32[1,32], index: 4, kind: input, shape index: {}]
  %s5 = inlined_call_operand.hbm [shape: f32[16,32], index: 5, kind: output, shape index: {}]
  %s6 = sld [smem:[#allocation0]]
  $region53: #{tpu_custom_call.1} parent=0
    _
  %s8 = ssub.s32 1, %s6
  %s9 = scalar_select 0, %s8, %s6
  $region1: #{tpu_custom_call.1} parent=0
    #allocation2 [shape = 'u8[8192]{0}', space=vmem, size = 0x2000, scoped, tag = 'output window, operand 0']
    #allocation3 [shape = 's32[2]{0}', space=sflag, size = 0x8, scoped, tag = 'scoped memory for tpu_custom_call.1']
    %10 = vsyncpa [#allocation3], 0
    %s11 = scalar_lea.sflag [#allocation3], 1
    %12 = vsyncpa %s11, 0
    loop: start=0, step=1, limit=4
    $region2: #{tpu_custom_call.1} parent=1 // loop_pre_header
      _
    $region3: #{tpu_custom_call.1} parent=1 // loop_header
      %s14 = sphi 0, %s18
      %p15 = scmp.ge.s32.totalorder %s14, 4
      %s24 = sphi 0, %s26
      %s27 = sphi 0, %s24
      %s28 = sphi 0, %s27
      %s44 = sphi 0, %s28
      %s48 = sphi 0, %s48
      %s50 = sphi 0, %s48
      %s51 = sphi 0, %s50
      %s65 = sphi 0, %s51
      %s69 = sphi 0, %s69
      %s71 = sphi 0, %s69
      %s72 = sphi 0, %s71
      %s86 = sphi 0, %s72
      %s90 = sphi 0, %s90
      %s92 = sphi 0, %s90
      %s93 = sphi 0, %s92
      %s107 = sphi 0, %s93
      %s111 = sphi 0, %s111
      %s113 = sphi 0, %s111
      %s114 = sphi 0, %s113
      %s128 = sphi 0, %s114
      %s134 = sphi 0, %s136
      %s137 = sphi 0, %s134
      %s138 = sphi 0, %s137
      %s154 = sphi 0, %s138
    $region4: #{tpu_custom_call.1} parent=1 // loop_header_branch
      %17 = sbr.rel (%p15) target = $region8
    $region5: #{tpu_custom_call.1} parent=1 // loop_body
      %s19 = ssub.s32 %s14, 1
      %s20 = ssub.s32 %s14, 2
      %s21 = sadd.s32 %s14, 1
      %s22 = ssub.s32 %s14, %s21
      %p23 = scmp.eq.s32.totalorder %s22, 0
      %s25 = sadd.s32 %s24, 1
      %s26 = scalar_select %p23, %s24, %s25
      %p29 = pneg %p23
      %p30 = scmp.eq.s32.totalorder %s14, 1
      %p31 = por %p29, %p30
      %p32 = scmp.ne.s32.totalorder %s24, %s27
      %p33 = scmp.eq.s32.totalorder %s14, 0
      %p34 = por %p32, %p33
      %p35 = scmp.ne.s32.totalorder %s24, %s27
      %p36 = scmp.eq.s32.totalorder %s19, 1
      %p37 = por %p35, %p36
      %p38 = scmp.ne.s32.totalorder %s27, %s28
      %p39 = scmp.eq.s32.totalorder %s19, 0
      %p40 = por %p38, %p39
      %p41 = scmp.ne.s32.totalorder %s27, %s28
      %p42 = scmp.eq.s32.totalorder %s20, 1
      %p43 = por %p41, %p42
      %p45 = scmp.ne.s32.totalorder %s28, %s44
      %p46 = scmp.eq.s32.totalorder %s20, 0
      %p47 = por %p45, %p46
      %s49 = sadd.s32 %s48, 1
      %p52 = scmp.eq.s32.totalorder %s14, 1
      %p53 = scmp.ne.s32.totalorder %s48, %s50
      %p54 = scmp.eq.s32.totalorder %s14, 0
      %p55 = por %p53, %p54
      %p56 = scmp.ne.s32.totalorder %s48, %s50
      %p57 = scmp.eq.s32.totalorder %s19, 1
      %p58 = por %p56, %p57
      %p59 = scmp.ne.s32.totalorder %s50, %s51
      %p60 = scmp.eq.s32.totalorder %s19, 0
      %p61 = por %p59, %p60
      %p62 = scmp.ne.s32.totalorder %s50, %s51
      %p63 = scmp.eq.s32.totalorder %s20, 1
      %p64 = por %p62, %p63
      %p66 = scmp.ne.s32.totalorder %s51, %s65
      %p67 = scmp.eq.s32.totalorder %s20, 0
      %p68 = por %p66, %p67
      %s70 = sadd.s32 %s69, 1
      %p73 = scmp.eq.s32.totalorder %s14, 1
      %p74 = scmp.ne.s32.totalorder %s69, %s71
      %p75 = scmp.eq.s32.totalorder %s14, 0
      %p76 = por %p74, %p75
      %p77 = scmp.ne.s32.totalorder %s69, %s71
      %p78 = scmp.eq.s32.totalorder %s19, 1
      %p79 = por %p77, %p78
      %p80 = scmp.ne.s32.totalorder %s71, %s72
      %p81 = scmp.eq.s32.totalorder %s19, 0
      %p82 = por %p80, %p81
      %p83 = scmp.ne.s32.totalorder %s71, %s72
      %p84 = scmp.eq.s32.totalorder %s20, 1
      %p85 = por %p83, %p84
      %p87 = scmp.ne.s32.totalorder %s72, %s86
      %p88 = scmp.eq.s32.totalorder %s20, 0
      %p89 = por %p87, %p88
      %s91 = sadd.s32 %s90, 1
      %p94 = scmp.eq.s32.totalorder %s14, 1
      %p95 = scmp.ne.s32.totalorder %s90, %s92
      %p96 = scmp.eq.s32.totalorder %s14, 0
      %p97 = por %p95, %p96
      %p98 = scmp.ne.s32.totalorder %s90, %s92
      %p99 = scmp.eq.s32.totalorder %s19, 1
      %p100 = por %p98, %p99
      %p101 = scmp.ne.s32.totalorder %s92, %s93
      %p102 = scmp.eq.s32.totalorder %s19, 0
      %p103 = por %p101, %p102
      %p104 = scmp.ne.s32.totalorder %s92, %s93
      %p105 = scmp.eq.s32.totalorder %s20, 1
      %p106 = por %p104, %p105
      %p108 = scmp.ne.s32.totalorder %s93, %s107
      %p109 = scmp.eq.s32.totalorder %s20, 0
      %p110 = por %p108, %p109
      %s112 = sadd.s32 %s111, 1
      %p115 = scmp.eq.s32.totalorder %s14, 1
      %p116 = scmp.ne.s32.totalorder %s111, %s113
      %p117 = scmp.eq.s32.totalorder %s14, 0
      %p118 = por %p116, %p117
      %p119 = scmp.ne.s32.totalorder %s111, %s113
      %p120 = scmp.eq.s32.totalorder %s19, 1
      %p121 = por %p119, %p120
      %p122 = scmp.ne.s32.totalorder %s113, %s114
      %p123 = scmp.eq.s32.totalorder %s19, 0
      %p124 = por %p122, %p123
      %p125 = scmp.ne.s32.totalorder %s113, %s114
      %p126 = scmp.eq.s32.totalorder %s20, 1
      %p127 = por %p125, %p126
      %p129 = scmp.ne.s32.totalorder %s114, %s128
      %p130 = scmp.eq.s32.totalorder %s20, 0
      %p131 = por %p129, %p130
      %s132 = ssub.s32 %s14, %s21
      %p133 = scmp.eq.s32.totalorder %s132, 0
      %s135 = sadd.s32 %s134, 1
      %s136 = scalar_select %p133, %s134, %s135
      %p139 = pneg %p133
      %p140 = scmp.eq.s32.totalorder %s14, 1
      %p141 = por %p139, %p140
      %p142 = scmp.ne.s32.totalorder %s134, %s137
      %p143 = scmp.eq.s32.totalorder %s14, 0
      %p144 = por %p142, %p143
      %p145 = scmp.ne.s32.totalorder %s134, %s137
      %p146 = scmp.eq.s32.totalorder %s19, 1
      %p147 = por %p145, %p146
      %p148 = scmp.ne.s32.totalorder %s137, %s138
      %p149 = scmp.eq.s32.totalorder %s19, 0
      %p150 = por %p148, %p149
      %p151 = scmp.ne.s32.totalorder %s137, %s138
      %p152 = scmp.eq.s32.totalorder %s20, 1
      %p153 = por %p151, %p152
      %p155 = scmp.ne.s32.totalorder %s138, %s154
      %p156 = scmp.eq.s32.totalorder %s20, 0
      %p157 = por %p155, %p156
      %p158 = scmp.le.s32.totalorder 1, %s14
      %p159 = scmp.lt.s32.totalorder %s14, 3
      %p160 = pnand %p158, %p159
      %p161 = pneg %p160
      // Predicated region
      $region9: #{tpu_custom_call.1} parent=5 // pred_check
        _
      $region10: #{tpu_custom_call.1} parent=5 // pred_check_branch
        %163 = sbr.rel (%p160) target = $region12
      $region11: #{tpu_custom_call.1} parent=5 // pred_region
        %s164 = ssub.s32 %s14, 1
        // Predicated region
        $region13: #{tpu_custom_call.1} parent=11 // pred_check
          %p165 = pneg %p61
        $region14: #{tpu_custom_call.1} parent=11 // pred_check_branch
          %167 = sbr.rel (%p165) target = $region16
        $region15: #{tpu_custom_call.1} parent=11 // pred_region
          _
        $region16: #{tpu_custom_call.1} parent=11 // pred_fallthru
          _
        // Predicated region
        $region17: #{tpu_custom_call.1} parent=11 // pred_check
          %p168 = pneg %p82
        $region18: #{tpu_custom_call.1} parent=11 // pred_check_branch
          %170 = sbr.rel (%p168) target = $region20
        $region19: #{tpu_custom_call.1} parent=11 // pred_region
          _
        $region20: #{tpu_custom_call.1} parent=11 // pred_fallthru
          _
        // Predicated region
        $region21: #{tpu_custom_call.1} parent=11 // pred_check
          %p171 = pneg %p103
        $region22: #{tpu_custom_call.1} parent=11 // pred_check_branch
          %173 = sbr.rel (%p171) target = $region24
        $region23: #{tpu_custom_call.1} parent=11 // pred_region
          _
        $region24: #{tpu_custom_call.1} parent=11 // pred_fallthru
          _
        // Predicated region
        $region25: #{tpu_custom_call.1} parent=11 // pred_check
          %p174 = pneg %p124
        $region26: #{tpu_custom_call.1} parent=11 // pred_check_branch
          %176 = sbr.rel (%p174) target = $region28
        $region27: #{tpu_custom_call.1} parent=11 // pred_region
          _
        $region28: #{tpu_custom_call.1} parent=11 // pred_fallthru
          _
      $region12: #{tpu_custom_call.1} parent=5 // pred_fallthru
        _
      %p177 = scmp.lt.s32.totalorder %s14, 2
      // Predicated region
      $region29: #{tpu_custom_call.1} parent=5 // pred_check
        %p178 = pneg %p177
      $region30: #{tpu_custom_call.1} parent=5 // pred_check_branch
        %180 = sbr.rel (%p178) target = $region32
      $region31: #{tpu_custom_call.1} parent=5 // pred_region
        // Predicated region
        $region33: #{tpu_custom_call.1} parent=31 // pred_check
          %p181 = pneg %p34
        $region34: #{tpu_custom_call.1} parent=31 // pred_check_branch
          %183 = sbr.rel (%p181) target = $region36
        $region35: #{tpu_custom_call.1} parent=31 // pred_region
          %p184 = scmp.lt.s32.totalorder %s14, 1
          %s185 = scalar_select %p184, %s14, 1
          %s186 = smul.addr %s185, 8
          %s187 = scalar_lea.vmem %s0, %s186
        $region36: #{tpu_custom_call.1} parent=31 // pred_fallthru
          _
      $region32: #{tpu_custom_call.1} parent=5 // pred_fallthru
        _
      %p188 = scmp.le.s32.totalorder 1, %s14
      %p189 = scmp.lt.s32.totalorder %s14, 3
      %p190 = pnand %p188, %p189
      %p191 = pneg %p190
      // Predicated region
      $region37: #{tpu_custom_call.1} parent=5 // pred_check
        _
      $region38: #{tpu_custom_call.1} parent=5 // pred_check_branch
        %193 = sbr.rel (%p190) target = $region40
      $region39: #{tpu_custom_call.1} parent=5 // pred_region
        %s194 = ssub.s32 %s14, 1
        %p195 = scmp.lt.s32.totalorder %s19, 1
        %s196 = scalar_select %p195, %s19, 1
        %s197 = smul.addr %s196, 8
        %s198 = scalar_lea.vmem %s0, %s197
        %p199 = pneg %p40
        %p200 = pneg %p37
        %p201 = pneg %p61
        %p202 = pneg %p58
        %p203 = pneg %p82
        %p204 = pneg %p79
        %p205 = pneg %p103
        %p206 = pneg %p100
        %p207 = pneg %p124
        %p208 = pneg %p121
        %p209 = pneg %p150
        %p210 = pneg %p147
        %s211 = sand.u32 %s137, 1
        %s212 = scalar_lea.sflag [#allocation3], %s211
        %s213 = sand.u32 %s137, 1
        %s214 = smul.addr %s213, 8
        %s215 = scalar_lea.vmem [#allocation2], %s214
        %p216 = scmp.lt.s32.totalorder %s19, 1
        %s217 = scalar_select %p216, %s19, 1
        %s218 = smul.addr %s217, 8
        %s219 = scalar_lea.vmem %s0, %s218
        %v221 = vld [vmem:[%s219] sm:$0xff]
        %v222 = vpack.c.bf16 %v221, %v221
        %v223 = vld [vmem:[%s1] sm:$0xf]
        %v224 = vld [vmem:[%s1 + $0x4] sm:$0xf]
        %v225 = vld [vmem:[%s1 + $0x8] sm:$0xf]
        %v226 = vld [vmem:[%s1 + $0xc] sm:$0xf]
        %v227 = vld [vmem:[%s2] sm:$0x1]
        %v229 = vperm.slane %v227, 0
        %v235 = vunpack.c.l.b16 %v223
        %v236 = vunpack.c.l.b16 %v224
        %v237 = vunpack.c.l.b16 %v225
        %v238 = vunpack.c.l.b16 %v226
        %v239 = vpack.c.b16 %v236, %v235
        %v240 = vpack.c.b16 %v238, %v237
        %vm243 = vcmask 261120
        %v245 = vsel %vm243, %v222, 0
        %247 = vmatpush.bf16.msra.mxu0 0
        %248 = vmatpush.bf16.msra.mxu0 0
        %249 = vmatpush.bf16.msra.mxu0 0
        %250 = vmatpush.bf16.msra.mxu0 0
        %251 = vmatpush.bf16.msra.mxu0 0
        %252 = vmatpush.bf16.msra.mxu0 0
        %253 = vmatpush.bf16.msra.mxu0 %v240
        %254 = vmatpush.bf16.msra.mxu0 %v239
        %255 = vmatmul.bf16.gmra.mxu0 %v245
        %v256 = vpop.f32.mrf.mxu0
        %v257 = vadd.f32 %v229, %v256
        %v258 = vpop.f32.mrf.mxu0
        %259 = vdwg.mxu0
        %v260 = vmul.f32 %v257, 0.5
        %v261 = vmul.f32 %v257, 0.70710677
        %v262 = vmul.f32 %v261, %v261
        %v263 = vmin.f32 16.0, %v262
        %v264 = vmul.f32 %v263, 2.1237322e-06
        %v265 = vadd.f32 %v264, 0.00028619796
        %v266 = vmul.f32 %v263, %v265
        %v267 = vadd.f32 %v266, 0.0036580483
        %v268 = vmul.f32 %v263, %v267
        %v269 = vadd.f32 %v268, 0.05243302
        %v270 = vmul.f32 %v263, %v269
        %v271 = vadd.f32 %v270, 0.18741608
        %v272 = vmul.f32 %v263, %v271
        %v273 = vadd.f32 %v272, 1.1283791
        %v274 = vmul.f32 %v261, %v273
        %v275 = vmul.f32 %v263, 3.8918573e-05
        %v276 = vadd.f32 %v275, 0.001143296
        %v277 = vmul.f32 %v263, %v276
        %v278 = vadd.f32 %v277, 0.014752088
        %v279 = vmul.f32 %v263, %v278
        %v280 = vadd.f32 %v279, 0.112945676
        %v281 = vmul.f32 %v263, %v280
        %v282 = vadd.f32 %v281, 0.4994258
        %v283 = vmul.f32 %v263, %v282
        %v284 = vadd.f32 %v283, 1.0
        %v285 = vrcp.pop %v284
        %v286 = vmul.f32 %v284, %v285
        %v287 = vsub.f32 1.0, %v286
        %v288 = vmul.f32 %v285, %v287
        %v289 = vadd.f32 %v285, %v288
        %vm290 = vweird.f32 %v284
        %vm291 = vweird.f32 %v285
        %vm292 = vmor %vm290, %vm291
        %v293 = vsel %vm292, %v285, %v289
        %v294 = vand.u32 2147483647, %v284
        %vm295 = vcmp.eq.f32.partialorder %v294, 8.507059e+37
        %v296 = vand.u32 %v284, 2147483648
        %v297 = vor.u32 1.1754944e-38, %v296
        %v298 = vsel %vm295, %v297, %v293
        %v299 = vmul.f32 %v274, %v298
        %v300 = vmin.f32 %v299, 1.0
        %v301 = vmax.f32 %v300, -1.0
        %v302 = vadd.f32 %v301, 1.0
        %v303 = vmul.f32 %v260, %v302
        %v304 = vpack.c.bf16 %v303, %v303
        %v305 = vld [vmem:[%s3] sm:$0xf]
        %v306 = vld [vmem:[%s3 + $0x4] sm:$0xf]
        %v307 = vld [vmem:[%s3 + $0x8] sm:$0xf]
        %v308 = vld [vmem:[%s3 + $0xc] sm:$0xf]
        %v309 = vld [vmem:[%s3 + $0x10] sm:$0xf]
        %v310 = vld [vmem:[%s3 + $0x14] sm:$0xf]
        %v311 = vld [vmem:[%s3 + $0x18] sm:$0xf]
        %v312 = vld [vmem:[%s3 + $0x1c] sm:$0xf]
        %v313 = vld [vmem:[%s3 + $0x20] sm:$0xf]
        %v314 = vld [vmem:[%s3 + $0x24] sm:$0xf]
        %v315 = vld [vmem:[%s3 + $0x28] sm:$0xf]
        %v316 = vld [vmem:[%s3 + $0x2c] sm:$0xf]
        %v317 = vld [vmem:[%s3 + $0x30] sm:$0xf]
        %v318 = vld [vmem:[%s3 + $0x34] sm:$0xf]
        %v319 = vld [vmem:[%s3 + $0x38] sm:$0xf]
        %v320 = vld [vmem:[%s3 + $0x3c] sm:$0xf]
        %v321 = vld [vmem:[%s4] sm:$0x1]
        %v323 = vperm.slane %v321, 0
        %v341 = vunpack.c.l.b16 %v305
        %v342 = vunpack.c.l.b16 %v306
        %v343 = vunpack.c.l.b16 %v307
        %v344 = vunpack.c.l.b16 %v308
        %v345 = vunpack.c.l.b16 %v309
        %v346 = vunpack.c.l.b16 %v310
        %v347 = vunpack.c.l.b16 %v311
        %v348 = vunpack.c.l.b16 %v312
        %v349 = vunpack.c.l.b16 %v313
        %v350 = vunpack.c.l.b16 %v314
        %v351 = vunpack.c.l.b16 %v315
        %v352 = vunpack.c.l.b16 %v316
        %v353 = vunpack.c.l.b16 %v317
        %v354 = vunpack.c.l.b16 %v318
        %v355 = vunpack.c.l.b16 %v319
        %v356 = vunpack.c.l.b16 %v320
        %v357 = vpack.c.b16 %v342, %v341
        %v358 = vpack.c.b16 %v344, %v343
        %v359 = vpack.c.b16 %v346, %v345
        %v360 = vpack.c.b16 %v348, %v347
        %v361 = vpack.c.b16 %v350, %v349
        %v362 = vpack.c.b16 %v352, %v351
        %v363 = vpack.c.b16 %v354, %v353
        %v364 = vpack.c.b16 %v356, %v355
        %373 = vmatpush.bf16.msra.mxu0 %v364
        %374 = vmatpush.bf16.msra.mxu0 %v363
        %375 = vmatpush.bf16.msra.mxu0 %v362
        %376 = vmatpush.bf16.msra.mxu0 %v361
        %377 = vmatpush.bf16.msra.mxu0 %v360
        %378 = vmatpush.bf16.msra.mxu0 %v359
        %379 = vmatpush.bf16.msra.mxu0 %v358
        %380 = vmatpush.bf16.msra.mxu0 %v357
        %381 = vmatmul.bf16.gmra.mxu0 %v304
        %v382 = vpop.f32.mrf.mxu0
        %v383 = vadd.f32 %v323, %v382
        %v384 = vpop.f32.mrf.mxu0
        %385 = vdwg.mxu0
        %386 = vst.msk [vmem:[%s215] sm:$0xff] %vm243, %v383
        %s387 = sand.u32 %s137, 1
        %s388 = scalar_lea.sflag [#allocation3], %s387
        %s389 = sand.u32 %s137, 1
        %s390 = smul.addr %s389, 8
        %s391 = scalar_lea.vmem [#allocation2], %s390
        // Predicated region
        $region41: #{tpu_custom_call.1} parent=39 // pred_check
          %p392 = pneg %p147
        $region42: #{tpu_custom_call.1} parent=39 // pred_check_branch
          %394 = sbr.rel (%p392) target = $region44
        $region43: #{tpu_custom_call.1} parent=39 // pred_region
          %396 = vsyncadd %s388, 0
          %s397 = smul.addr %s19, 8
          %s398 = scalar_lea.hbm %s5, %s397
          %s400 = sshll.u32 %s391, 4
          %s401 = int_to_ptr.vmem [resolvable:$true] %s400
          %s402 = sshll.u32 %s398, 4
          %s403 = int_to_ptr.hbm [resolvable:$true] %s402
          %405 = dma.vmem_to_hbm [thread:$0]  %s401, 128, %s403, %s388
        $region44: #{tpu_custom_call.1} parent=39 // pred_fallthru
          _
      $region40: #{tpu_custom_call.1} parent=5 // pred_fallthru
        _
      %p406 = scmp.le.s32.totalorder 2, %s14
      // Predicated region
      $region45: #{tpu_custom_call.1} parent=5 // pred_check
        %p407 = pneg %p406
      $region46: #{tpu_custom_call.1} parent=5 // pred_check_branch
        %409 = sbr.rel (%p407) target = $region48
      $region47: #{tpu_custom_call.1} parent=5 // pred_region
        %s410 = ssub.s32 %s14, 2
        // Predicated region
        $region49: #{tpu_custom_call.1} parent=47 // pred_check
          %p411 = pneg %p153
        $region50: #{tpu_custom_call.1} parent=47 // pred_check_branch
          %413 = sbr.rel (%p411) target = $region52
        $region51: #{tpu_custom_call.1} parent=47 // pred_region
          %s414 = sand.u32 %s138, 1
          %s415 = scalar_lea.sflag [#allocation3], %s414
          %s416 = sand.u32 %s138, 1
          %s417 = smul.addr %s416, 8
          %s418 = scalar_lea.vmem [#allocation2], %s417
          %420 = dma.done %s415, 128
        $region52: #{tpu_custom_call.1} parent=47 // pred_fallthru
          _
      $region48: #{tpu_custom_call.1} parent=5 // pred_fallthru
        _
    $region6: #{tpu_custom_call.1} parent=1 // loop_footer
      %s18 = sadd.s32 1, %s14
    $region7: #{tpu_custom_call.1} parent=1 // loop_footer_branch
      %13 = sbr.rel target = $region3
    $region8: #{tpu_custom_call.1} parent=1 // loop_exit
      _
    %421 = vsyncpa [#allocation3], 1
    %s422 = scalar_lea.sflag [#allocation3], 1
    %423 = vsyncpa %s422, 1

</llo_original>
